<compile_context>
chip_gen: v7x
topology: tpu7x:2x2x1
jax: 0.10.0
libtpu: 0.0.40
codegen_flags: <defaults>
</compile_context>

<pallas_src>
import functools

import jax
import jax.numpy as jnp
from jax.experimental import pallas as pl
from jax.experimental.pallas import tpu as pltpu


N_LAYERS = 6
LANE = 128


def _census_mlp_kernel(nsub, sub, compute_dtype,
                       x_ref,
                       w1_ref, b1_ref,
                       w2_ref, b2_ref,
                       w3_ref, b3_ref,
                       w4_ref, b4_ref,
                       w5_ref, b5_ref,
                       w6_ref, b6_ref,
                       o_ref):
    """Activations are (features, lanes); weights are (out, in) (PyTorch layout)."""
    layer_refs = ((w1_ref, b1_ref), (w2_ref, b2_ref), (w3_ref, b3_ref),
                  (w4_ref, b4_ref), (w5_ref, b5_ref), (w6_ref, b6_ref))

    # Weights are tiny (<5 KiB total) and VMEM-resident; load them once per step.
    ws = [w_ref[...] for (w_ref, _) in layer_refs]          # compute_dtype
    bs = [b_ref[...] for (_, b_ref) in layer_refs]          # f32, shape (out, 1)

    # Independent lane sub-chunks: static unrolled loop so the scheduler can
    # interleave layer k of chunk c+1 with layer k+1 of chunk c (hides MXU drain).
    for c in range(nsub):
        lo = c * sub
        h = x_ref[:, lo:lo + sub]                            # (13, sub) f32
        for li in range(N_LAYERS):
            y = jnp.dot(ws[li], h.astype(compute_dtype),
                        preferred_element_type=jnp.float32) + bs[li]
            h = jnp.maximum(y, 0.0) if li < N_LAYERS - 1 else y
        o_ref[:, lo:lo + sub] = h.astype(o_ref.dtype)        # lane-dense store


def census_net_forward(x, params, *, tb=512, compute_dtype=jnp.bfloat16):
    """x: (B, 13) float32 (or (B, ...) flattened to 13 features).
    params: list of 6 (W, b) with W shaped (out, in) and b shaped (out, 1),
    matching PyTorch nn.Linear orientation.  Returns (B, 2) float32."""
    B = x.shape[0]
    x2d = x.reshape(B, -1).astype(jnp.float32)               # torch.flatten(x, 1)
    in_dim = x2d.shape[1]
    out_dim = params[-1][0].shape[0]

    # --- batch tiling: pad to a multiple of the lane tile ---
    tb = max(LANE, (tb // LANE) * LANE)
    b128 = ((B + LANE - 1) // LANE) * LANE
    tb = min(tb, b128)
    b_pad = ((b128 + tb - 1) // tb) * tb
    num_tiles = b_pad // tb

    # Sub-chunk interleave inside a step (each sub-chunk stays lane-aligned).
    nsub = 2 if (tb % (2 * LANE) == 0) else 1
    sub = tb // nsub

    # Batch on lanes: x_t is (13, B_pad), zero-padded columns.
    x_t = jnp.pad(x2d.T, ((0, 0), (0, b_pad - B)))

    flat_args = [x_t]
    in_specs = [pl.BlockSpec((in_dim, tb), lambda i: (0, i))]
    for (w, b) in params:
        w_c = w.astype(compute_dtype)                        # pre-cast once
        b_c = b.astype(jnp.float32)
        flat_args.append(w_c)
        in_specs.append(pl.BlockSpec(w_c.shape, lambda i: (0, 0)))  # resident
        flat_args.append(b_c)
        in_specs.append(pl.BlockSpec(b_c.shape, lambda i: (0, 0)))  # resident

    kernel = functools.partial(_census_mlp_kernel, nsub, sub, compute_dtype)

    out_t = pl.pallas_call(
        kernel,
        out_shape=jax.ShapeDtypeStruct((out_dim, b_pad), jnp.float32),
        grid=(num_tiles,),
        in_specs=in_specs,
        out_specs=pl.BlockSpec((out_dim, tb), lambda i: (0, i)),
        compiler_params=pltpu.CompilerParams(
            dimension_semantics=("parallel",)),
    )(*flat_args)

    return out_t[:, :B].T                                    # (B, 2)


def init_params(key):
    """Deterministic init mimicking nn.Linear default (uniform +/- 1/sqrt(fan_in)).
    Weights in PyTorch (out, in) orientation, biases (out, 1)."""
    dims = [13, 64, 32, 16, 8, 4, 2]
    params = []
    for i in range(len(dims) - 1):
        fan_in, fan_out = dims[i], dims[i + 1]
        key, kw, kb = jax.random.split(key, 3)
        bound = 1.0 / (fan_in ** 0.5)
        w = jax.random.uniform(kw, (fan_out, fan_in), jnp.float32, -bound, bound)
        b = jax.random.uniform(kb, (fan_out, 1), jnp.float32, -bound, bound)
        params.append((w, b))
    return params


def reference_forward(x, params, compute_dtype=jnp.float32):
    """Pure-JAX reference matching the PyTorch forward (y = x @ W.T + b)."""
    h = x.reshape(x.shape[0], -1).astype(jnp.float32)
    n = len(params)
    for i, (w, b) in enumerate(params):
        h = jnp.dot(h.astype(compute_dtype), w.T.astype(compute_dtype),
                    preferred_element_type=jnp.float32,
                    precision=jax.lax.Precision.HIGHEST) + b.T
        if i < n - 1:
            h = jnp.maximum(h, 0.0)
    return h


if __name__ == "__main__":
    key = jax.random.PRNGKey(0)
    kx, kx2, kp = jax.random.split(key, 3)
    params = init_params(kp)

    # Small-shape test (B=8): one 128-lane tile, pad columns sliced off.
    batch = 8
    x = jax.random.normal(kx, (batch, 13), dtype=jnp.float32)
    out = jax.block_until_ready(census_net_forward(x, params))
    assert out.shape == (batch, 2), out.shape

    ref_matched = reference_forward(x, params, compute_dtype=jnp.bfloat16)
    assert jnp.allclose(out, ref_matched, atol=2e-4, rtol=2e-4), (out, ref_matched)
    ref_f32 = reference_forward(x, params, compute_dtype=jnp.float32)
    assert jnp.allclose(out, ref_f32, atol=5e-2, rtol=5e-2), (out, ref_f32)

    # Moderate batch (non-multiple of 128) to exercise the batch grid, padding,
    # resident weights and sub-chunk interleave.
    batch2 = 1000
    x2 = jax.random.normal(kx2, (batch2, 13), dtype=jnp.float32)
    out2 = jax.block_until_ready(census_net_forward(x2, params, tb=512))
    assert out2.shape == (batch2, 2), out2.shape
    ref2 = reference_forward(x2, params, compute_dtype=jnp.bfloat16)
    assert jnp.allclose(out2, ref2, atol=2e-4, rtol=2e-4)

    print("KERNEL_OK")
</pallas_src>

<mosaic_0001>
module attributes {stable_mosaic.version = 11 : i64} {
  func.func @_census_mlp_kernel(%arg0: i32, %arg1: memref<13x128xf32, #tpu.memory_space<vmem>>, %arg2: memref<64x13xbf16, #tpu.memory_space<vmem>>, %arg3: memref<64x1xf32, #tpu.memory_space<vmem>>, %arg4: memref<32x64xbf16, #tpu.memory_space<vmem>>, %arg5: memref<32x1xf32, #tpu.memory_space<vmem>>, %arg6: memref<16x32xbf16, #tpu.memory_space<vmem>>, %arg7: memref<16x1xf32, #tpu.memory_space<vmem>>, %arg8: memref<8x16xbf16, #tpu.memory_space<vmem>>, %arg9: memref<8x1xf32, #tpu.memory_space<vmem>>, %arg10: memref<4x8xbf16, #tpu.memory_space<vmem>>, %arg11: memref<4x1xf32, #tpu.memory_space<vmem>>, %arg12: memref<2x4xbf16, #tpu.memory_space<vmem>>, %arg13: memref<2x1xf32, #tpu.memory_space<vmem>>, %arg14: memref<2x128xf32, #tpu.memory_space<vmem>>) attributes {dimension_semantics = [#tpu.dimension_semantics<parallel>], iteration_bounds = array<i64: 1>, scalar_prefetch = 0 : i64, scratch_operands = 0 : i64, tpu.core_type = #tpu.core_type<tc>, window_params = [{transform_indices = @transform_0, window_bounds = array<i64: 13, 128>}, {pipeline_mode = #tpu.pipeline_mode<synchronous>, transform_indices = @transform_1, window_bounds = array<i64: 64, 13>}, {pipeline_mode = #tpu.pipeline_mode<synchronous>, transform_indices = @transform_2, window_bounds = array<i64: 64, 1>}, {pipeline_mode = #tpu.pipeline_mode<synchronous>, transform_indices = @transform_3, window_bounds = array<i64: 32, 64>}, {pipeline_mode = #tpu.pipeline_mode<synchronous>, transform_indices = @transform_4, window_bounds = array<i64: 32, 1>}, {pipeline_mode = #tpu.pipeline_mode<synchronous>, transform_indices = @transform_5, window_bounds = array<i64: 16, 32>}, {pipeline_mode = #tpu.pipeline_mode<synchronous>, transform_indices = @transform_6, window_bounds = array<i64: 16, 1>}, {pipeline_mode = #tpu.pipeline_mode<synchronous>, transform_indices = @transform_7, window_bounds = array<i64: 8, 16>}, {pipeline_mode = #tpu.pipeline_mode<synchronous>, transform_indices = @transform_8, window_bounds = array<i64: 8, 1>}, {pipeline_mode = #tpu.pipeline_mode<synchronous>, transform_indices = @transform_9, window_bounds = array<i64: 4, 8>}, {pipeline_mode = #tpu.pipeline_mode<synchronous>, transform_indices = @transform_10, window_bounds = array<i64: 4, 1>}, {pipeline_mode = #tpu.pipeline_mode<synchronous>, transform_indices = @transform_11, window_bounds = array<i64: 2, 4>}, {pipeline_mode = #tpu.pipeline_mode<synchronous>, transform_indices = @transform_12, window_bounds = array<i64: 2, 1>}, {transform_indices = @transform_13, window_bounds = array<i64: 2, 128>}]} {
    %c0 = arith.constant 0 : index
    %c0_0 = arith.constant 0 : index
    %0 = vector.load %arg2[%c0, %c0_0] : memref<64x13xbf16, #tpu.memory_space<vmem>>, vector<64x13xbf16>
    %c0_1 = arith.constant 0 : index
    %c0_2 = arith.constant 0 : index
    %1 = vector.load %arg4[%c0_1, %c0_2] : memref<32x64xbf16, #tpu.memory_space<vmem>>, vector<32x64xbf16>
    %c0_3 = arith.constant 0 : index
    %c0_4 = arith.constant 0 : index
    %2 = vector.load %arg6[%c0_3, %c0_4] : memref<16x32xbf16, #tpu.memory_space<vmem>>, vector<16x32xbf16>
    %c0_5 = arith.constant 0 : index
    %c0_6 = arith.constant 0 : index
    %3 = vector.load %arg8[%c0_5, %c0_6] : memref<8x16xbf16, #tpu.memory_space<vmem>>, vector<8x16xbf16>
    %c0_7 = arith.constant 0 : index
    %c0_8 = arith.constant 0 : index
    %4 = vector.load %arg10[%c0_7, %c0_8] : memref<4x8xbf16, #tpu.memory_space<vmem>>, vector<4x8xbf16>
    %c0_9 = arith.constant 0 : index
    %c0_10 = arith.constant 0 : index
    %5 = vector.load %arg12[%c0_9, %c0_10] : memref<2x4xbf16, #tpu.memory_space<vmem>>, vector<2x4xbf16>
    %c0_11 = arith.constant 0 : index
    %c0_12 = arith.constant 0 : index
    %6 = vector.load %arg3[%c0_11, %c0_12] : memref<64x1xf32, #tpu.memory_space<vmem>>, vector<64x1xf32>
    %c0_13 = arith.constant 0 : index
    %c0_14 = arith.constant 0 : index
    %7 = vector.load %arg5[%c0_13, %c0_14] : memref<32x1xf32, #tpu.memory_space<vmem>>, vector<32x1xf32>
    %c0_15 = arith.constant 0 : index
    %c0_16 = arith.constant 0 : index
    %8 = vector.load %arg7[%c0_15, %c0_16] : memref<16x1xf32, #tpu.memory_space<vmem>>, vector<16x1xf32>
    %c0_17 = arith.constant 0 : index
    %c0_18 = arith.constant 0 : index
    %9 = vector.load %arg9[%c0_17, %c0_18] : memref<8x1xf32, #tpu.memory_space<vmem>>, vector<8x1xf32>
    %c0_19 = arith.constant 0 : index
    %c0_20 = arith.constant 0 : index
    %10 = vector.load %arg11[%c0_19, %c0_20] : memref<4x1xf32, #tpu.memory_space<vmem>>, vector<4x1xf32>
    %c0_21 = arith.constant 0 : index
    %c0_22 = arith.constant 0 : index
    %11 = vector.load %arg13[%c0_21, %c0_22] : memref<2x1xf32, #tpu.memory_space<vmem>>, vector<2x1xf32>
    %c0_23 = arith.constant 0 : index
    %c0_24 = arith.constant 0 : index
    %12 = vector.load %arg1[%c0_23, %c0_24] : memref<13x128xf32, #tpu.memory_space<vmem>>, vector<13x128xf32>
    %13 = arith.truncf %12 : vector<13x128xf32> to vector<13x128xbf16>
    %cst = arith.constant dense<0.000000e+00> : vector<64x128xf32>
    %14 = tpu.matmul %0, %13, %cst {dimension_numbers = #tpu.dot_dimension_numbers<[1], [0], [0], [1], [0, 0, 1, 1], [], []>} : vector<64x13xbf16>, vector<13x128xbf16>, vector<64x128xf32> -> vector<64x128xf32>
    %15 = vector.broadcast %6 : vector<64x1xf32> to vector<64x128xf32>
    %16 = arith.addf %14, %15 : vector<64x128xf32>
    %cst_25 = arith.constant 0.000000e+00 : f32
    %17 = vector.broadcast %cst_25 : f32 to vector<64x128xf32>
    %18 = arith.maximumf %16, %17 : vector<64x128xf32>
    %19 = arith.truncf %18 : vector<64x128xf32> to vector<64x128xbf16>
    %cst_26 = arith.constant dense<0.000000e+00> : vector<32x128xf32>
    %20 = tpu.matmul %1, %19, %cst_26 {dimension_numbers = #tpu.dot_dimension_numbers<[1], [0], [0], [1], [0, 0, 1, 1], [], []>} : vector<32x64xbf16>, vector<64x128xbf16>, vector<32x128xf32> -> vector<32x128xf32>
    %21 = vector.broadcast %7 : vector<32x1xf32> to vector<32x128xf32>
    %22 = arith.addf %20, %21 : vector<32x128xf32>
    %cst_27 = arith.constant 0.000000e+00 : f32
    %23 = vector.broadcast %cst_27 : f32 to vector<32x128xf32>
    %24 = arith.maximumf %22, %23 : vector<32x128xf32>
    %25 = arith.truncf %24 : vector<32x128xf32> to vector<32x128xbf16>
    %cst_28 = arith.constant dense<0.000000e+00> : vector<16x128xf32>
    %26 = tpu.matmul %2, %25, %cst_28 {dimension_numbers = #tpu.dot_dimension_numbers<[1], [0], [0], [1], [0, 0, 1, 1], [], []>} : vector<16x32xbf16>, vector<32x128xbf16>, vector<16x128xf32> -> vector<16x128xf32>
    %27 = vector.broadcast %8 : vector<16x1xf32> to vector<16x128xf32>
    %28 = arith.addf %26, %27 : vector<16x128xf32>
    %cst_29 = arith.constant 0.000000e+00 : f32
    %29 = vector.broadcast %cst_29 : f32 to vector<16x128xf32>
    %30 = arith.maximumf %28, %29 : vector<16x128xf32>
    %31 = arith.truncf %30 : vector<16x128xf32> to vector<16x128xbf16>
    %cst_30 = arith.constant dense<0.000000e+00> : vector<8x128xf32>
    %32 = tpu.matmul %3, %31, %cst_30 {dimension_numbers = #tpu.dot_dimension_numbers<[1], [0], [0], [1], [0, 0, 1, 1], [], []>} : vector<8x16xbf16>, vector<16x128xbf16>, vector<8x128xf32> -> vector<8x128xf32>
    %33 = vector.broadcast %9 : vector<8x1xf32> to vector<8x128xf32>
    %34 = arith.addf %32, %33 : vector<8x128xf32>
    %cst_31 = arith.constant 0.000000e+00 : f32
    %35 = vector.broadcast %cst_31 : f32 to vector<8x128xf32>
    %36 = arith.maximumf %34, %35 : vector<8x128xf32>
    %37 = arith.truncf %36 : vector<8x128xf32> to vector<8x128xbf16>
    %cst_32 = arith.constant dense<0.000000e+00> : vector<4x128xf32>
    %38 = tpu.matmul %4, %37, %cst_32 {dimension_numbers = #tpu.dot_dimension_numbers<[1], [0], [0], [1], [0, 0, 1, 1], [], []>} : vector<4x8xbf16>, vector<8x128xbf16>, vector<4x128xf32> -> vector<4x128xf32>
    %39 = vector.broadcast %10 : vector<4x1xf32> to vector<4x128xf32>
    %40 = arith.addf %38, %39 : vector<4x128xf32>
    %cst_33 = arith.constant 0.000000e+00 : f32
    %41 = vector.broadcast %cst_33 : f32 to vector<4x128xf32>
    %42 = arith.maximumf %40, %41 : vector<4x128xf32>
    %43 = arith.truncf %42 : vector<4x128xf32> to vector<4x128xbf16>
    %cst_34 = arith.constant dense<0.000000e+00> : vector<2x128xf32>
    %44 = tpu.matmul %5, %43, %cst_34 {dimension_numbers = #tpu.dot_dimension_numbers<[1], [0], [0], [1], [0, 0, 1, 1], [], []>} : vector<2x4xbf16>, vector<4x128xbf16>, vector<2x128xf32> -> vector<2x128xf32>
    %45 = vector.broadcast %11 : vector<2x1xf32> to vector<2x128xf32>
    %46 = arith.addf %44, %45 : vector<2x128xf32>
    %c0_35 = arith.constant 0 : index
    %c0_36 = arith.constant 0 : index
    %47 = vector.load %arg14[%c0_35, %c0_36] : memref<2x128xf32, #tpu.memory_space<vmem>>, vector<2x128xf32>
    tpu.vector_store %arg14[%c0_35, %c0_36], %46 {strides = array<i32>} : memref<2x128xf32, #tpu.memory_space<vmem>>, vector<2x128xf32>,
    return
  }
  func.func @transform_0(%arg0: i32) -> (i32, i32) {
    %c0_i32 = arith.constant 0 : i32
    %c0_i32_0 = arith.constant 0 : i32
    return %c0_i32, %arg0 : i32, i32
  }
  func.func @transform_1(%arg0: i32) -> (i32, i32) {
    %c0_i32 = arith.constant 0 : i32
    %c0_i32_0 = arith.constant 0 : i32
    %c0_i32_1 = arith.constant 0 : i32
    return %c0_i32, %c0_i32_0 : i32, i32
  }
  func.func @transform_2(%arg0: i32) -> (i32, i32) {
    %c0_i32 = arith.constant 0 : i32
    %c0_i32_0 = arith.constant 0 : i32
    %c0_i32_1 = arith.constant 0 : i32
    return %c0_i32, %c0_i32_0 : i32, i32
  }
  func.func @transform_3(%arg0: i32) -> (i32, i32) {
    %c0_i32 = arith.constant 0 : i32
    %c0_i32_0 = arith.constant 0 : i32
    %c0_i32_1 = arith.constant 0 : i32
    return %c0_i32, %c0_i32_0 : i32, i32
  }
  func.func @transform_4(%arg0: i32) -> (i32, i32) {
    %c0_i32 = arith.constant 0 : i32
    %c0_i32_0 = arith.constant 0 : i32
    %c0_i32_1 = arith.constant 0 : i32
    return %c0_i32, %c0_i32_0 : i32, i32
  }
  func.func @transform_5(%arg0: i32) -> (i32, i32) {
    %c0_i32 = arith.constant 0 : i32
    %c0_i32_0 = arith.constant 0 : i32
    %c0_i32_1 = arith.constant 0 : i32
    return %c0_i32, %c0_i32_0 : i32, i32
  }
  func.func @transform_6(%arg0: i32) -> (i32, i32) {
    %c0_i32 = arith.constant 0 : i32
    %c0_i32_0 = arith.constant 0 : i32
    %c0_i32_1 = arith.constant 0 : i32
    return %c0_i32, %c0_i32_0 : i32, i32
  }
  func.func @transform_7(%arg0: i32) -> (i32, i32) {
    %c0_i32 = arith.constant 0 : i32
    %c0_i32_0 = arith.constant 0 : i32
    %c0_i32_1 = arith.constant 0 : i32
    return %c0_i32, %c0_i32_0 : i32, i32
  }
  func.func @transform_8(%arg0: i32) -> (i32, i32) {
    %c0_i32 = arith.constant 0 : i32
    %c0_i32_0 = arith.constant 0 : i32
    %c0_i32_1 = arith.constant 0 : i32
    return %c0_i32, %c0_i32_0 : i32, i32
  }
  func.func @transform_9(%arg0: i32) -> (i32, i32) {
    %c0_i32 = arith.constant 0 : i32
    %c0_i32_0 = arith.constant 0 : i32
    %c0_i32_1 = arith.constant 0 : i32
    return %c0_i32, %c0_i32_0 : i32, i32
  }
  func.func @transform_10(%arg0: i32) -> (i32, i32) {
    %c0_i32 = arith.constant 0 : i32
    %c0_i32_0 = arith.constant 0 : i32
    %c0_i32_1 = arith.constant 0 : i32
    return %c0_i32, %c0_i32_0 : i32, i32
  }
  func.func @transform_11(%arg0: i32) -> (i32, i32) {
    %c0_i32 = arith.constant 0 : i32
    %c0_i32_0 = arith.constant 0 : i32
    %c0_i32_1 = arith.constant 0 : i32
    return %c0_i32, %c0_i32_0 : i32, i32
  }
  func.func @transform_12(%arg0: i32) -> (i32, i32) {
    %c0_i32 = arith.constant 0 : i32
    %c0_i32_0 = arith.constant 0 : i32
    %c0_i32_1 = arith.constant 0 : i32
    return %c0_i32, %c0_i32_0 : i32, i32
  }
  func.func @transform_13(%arg0: i32) -> (i32, i32) {
    %c0_i32 = arith.constant 0 : i32
    %c0_i32_0 = arith.constant 0 : i32
    return %c0_i32, %arg0 : i32, i32
  }
}

</mosaic_0001>

<llo_original>
// kernel: tpu_custom_call.1
$region0: #{tpu_custom_call.1}
  #allocation0 [shape = 'u32[]', space=smem, size = 0x4, offset = 0x4, fixed_abs, tag = 'smem constant byte address 0x4 - core index']
  #allocation1 [shape = 'u32[144,128]{1,0:T(1,128)}', space=vmem, size = 0x12000, scoped, tag = 'internal scratch']
  %s0 = inlined_call_operand.vmem [shape: f32[13,128], index: 0, kind: input, shape index: {}]
  %s1 = inlined_call_operand.vmem [shape: bf16[64,13], index: 1, kind: input, shape index: {}]
  %s2 = inlined_call_operand.vmem [shape: f32[64,1], index: 2, kind: input, shape index: {}]
  %s3 = inlined_call_operand.vmem [shape: bf16[32,64], index: 3, kind: input, shape index: {}]
  %s4 = inlined_call_operand.vmem [shape: f32[32,1], index: 4, kind: input, shape index: {}]
  %s5 = inlined_call_operand.vmem [shape: bf16[16,32], index: 5, kind: input, shape index: {}]
  %s6 = inlined_call_operand.vmem [shape: f32[16,1], index: 6, kind: input, shape index: {}]
  %s7 = inlined_call_operand.vmem [shape: bf16[8,16], index: 7, kind: input, shape index: {}]
  %s8 = inlined_call_operand.vmem [shape: f32[8,1], index: 8, kind: input, shape index: {}]
  %s9 = inlined_call_operand.vmem [shape: bf16[4,8], index: 9, kind: input, shape index: {}]
  %s10 = inlined_call_operand.vmem [shape: f32[4,1], index: 10, kind: input, shape index: {}]
  %s11 = inlined_call_operand.vmem [shape: bf16[2,4], index: 11, kind: input, shape index: {}]
  %s12 = inlined_call_operand.vmem [shape: f32[2,1], index: 12, kind: input, shape index: {}]
  %s13 = inlined_call_operand.hbm [shape: f32[2,128], index: 13, kind: output, shape index: {}]
  %s14 = sld [smem:[#allocation0]]
  $region62: #{tpu_custom_call.1} parent=0
    _
  %s16 = ssub.s32 1, %s14
  %s17 = scalar_select 0, %s16, %s14
  $region1: #{tpu_custom_call.1} parent=0
    #allocation2 [shape = 'u8[1024]{0}', space=vmem, size = 0x400, scoped, tag = 'output window, operand 0, single buffered']
    #allocation3 [shape = 's32[1]{0}', space=sflag, size = 0x4, scoped, tag = 'scoped memory for tpu_custom_call.1']
    %18 = vsyncpa [#allocation3], 0
    // Predicated region
    $region2: #{tpu_custom_call.1} parent=1 // pred_check
      _
    $region3: #{tpu_custom_call.1} parent=1 // pred_check_branch
      %20 = sbr.rel (0) target = $region5
    $region4: #{tpu_custom_call.1} parent=1 // pred_region
      _
    $region5: #{tpu_custom_call.1} parent=1 // pred_fallthru
      _
    // Predicated region
    $region6: #{tpu_custom_call.1} parent=1 // pred_check
      _
    $region7: #{tpu_custom_call.1} parent=1 // pred_check_branch
      %22 = sbr.rel (0) target = $region9
    $region8: #{tpu_custom_call.1} parent=1 // pred_region
      _
    $region9: #{tpu_custom_call.1} parent=1 // pred_fallthru
      _
    // Predicated region
    $region10: #{tpu_custom_call.1} parent=1 // pred_check
      _
    $region11: #{tpu_custom_call.1} parent=1 // pred_check_branch
      %24 = sbr.rel (0) target = $region13
    $region12: #{tpu_custom_call.1} parent=1 // pred_region
      _
    $region13: #{tpu_custom_call.1} parent=1 // pred_fallthru
      _
    // Predicated region
    $region14: #{tpu_custom_call.1} parent=1 // pred_check
      _
    $region15: #{tpu_custom_call.1} parent=1 // pred_check_branch
      %26 = sbr.rel (0) target = $region17
    $region16: #{tpu_custom_call.1} parent=1 // pred_region
      _
    $region17: #{tpu_custom_call.1} parent=1 // pred_fallthru
      _
    // Predicated region
    $region18: #{tpu_custom_call.1} parent=1 // pred_check
      _
    $region19: #{tpu_custom_call.1} parent=1 // pred_check_branch
      %28 = sbr.rel (0) target = $region21
    $region20: #{tpu_custom_call.1} parent=1 // pred_region
      _
    $region21: #{tpu_custom_call.1} parent=1 // pred_fallthru
      _
    // Predicated region
    $region22: #{tpu_custom_call.1} parent=1 // pred_check
      _
    $region23: #{tpu_custom_call.1} parent=1 // pred_check_branch
      %30 = sbr.rel (0) target = $region25
    $region24: #{tpu_custom_call.1} parent=1 // pred_region
      _
    $region25: #{tpu_custom_call.1} parent=1 // pred_fallthru
      _
    // Predicated region
    $region26: #{tpu_custom_call.1} parent=1 // pred_check
      _
    $region27: #{tpu_custom_call.1} parent=1 // pred_check_branch
      %32 = sbr.rel (0) target = $region29
    $region28: #{tpu_custom_call.1} parent=1 // pred_region
      _
    $region29: #{tpu_custom_call.1} parent=1 // pred_fallthru
      _
    // Predicated region
    $region30: #{tpu_custom_call.1} parent=1 // pred_check
      _
    $region31: #{tpu_custom_call.1} parent=1 // pred_check_branch
      %34 = sbr.rel (0) target = $region33
    $region32: #{tpu_custom_call.1} parent=1 // pred_region
      _
    $region33: #{tpu_custom_call.1} parent=1 // pred_fallthru
      _
    // Predicated region
    $region34: #{tpu_custom_call.1} parent=1 // pred_check
      _
    $region35: #{tpu_custom_call.1} parent=1 // pred_check_branch
      %36 = sbr.rel (0) target = $region37
    $region36: #{tpu_custom_call.1} parent=1 // pred_region
      _
    $region37: #{tpu_custom_call.1} parent=1 // pred_fallthru
      _
    // Predicated region
    $region38: #{tpu_custom_call.1} parent=1 // pred_check
      _
    $region39: #{tpu_custom_call.1} parent=1 // pred_check_branch
      %38 = sbr.rel (0) target = $region41
    $region40: #{tpu_custom_call.1} parent=1 // pred_region
      _
    $region41: #{tpu_custom_call.1} parent=1 // pred_fallthru
      _
    // Predicated region
    $region42: #{tpu_custom_call.1} parent=1 // pred_check
      _
    $region43: #{tpu_custom_call.1} parent=1 // pred_check_branch
      %40 = sbr.rel (0) target = $region45
    $region44: #{tpu_custom_call.1} parent=1 // pred_region
      _
    $region45: #{tpu_custom_call.1} parent=1 // pred_fallthru
      _
    // Predicated region
    $region46: #{tpu_custom_call.1} parent=1 // pred_check
      _
    $region47: #{tpu_custom_call.1} parent=1 // pred_check_branch
      %42 = sbr.rel (0) target = $region49
    $region48: #{tpu_custom_call.1} parent=1 // pred_region
      _
    $region49: #{tpu_custom_call.1} parent=1 // pred_fallthru
      _
    // Predicated region
    $region50: #{tpu_custom_call.1} parent=1 // pred_check
      _
    $region51: #{tpu_custom_call.1} parent=1 // pred_check_branch
      %44 = sbr.rel (0) target = $region53
    $region52: #{tpu_custom_call.1} parent=1 // pred_region
      _
    $region53: #{tpu_custom_call.1} parent=1 // pred_fallthru
      _
    %v46 = vld [vmem:[%s1] sm:$0xf]
    %v47 = vld [vmem:[%s1 + $0x4] sm:$0xf]
    %v48 = vld [vmem:[%s1 + $0x8] sm:$0xf]
    %v49 = vld [vmem:[%s1 + $0xc] sm:$0xf]
    %v50 = vld [vmem:[%s1 + $0x10] sm:$0xf]
    %v51 = vld [vmem:[%s1 + $0x14] sm:$0xf]
    %v52 = vld [vmem:[%s1 + $0x18] sm:$0xf]
    %v53 = vld [vmem:[%s1 + $0x1c] sm:$0xf]
    %v54 = vld [vmem:[%s3] sm:$0xf]
    %v55 = vld [vmem:[%s3 + $0x4] sm:$0xf]
    %v56 = vld [vmem:[%s3 + $0x8] sm:$0xf]
    %v57 = vld [vmem:[%s3 + $0xc] sm:$0xf]
    %v58 = vld [vmem:[%s5] sm:$0xf]
    %v59 = vld [vmem:[%s5 + $0x4] sm:$0xf]
    %v60 = vld [vmem:[%s7] sm:$0xf]
    %v61 = vld [vmem:[%s9] sm:$0x3]
    %v62 = vld [vmem:[%s11] sm:$0x1]
    %v63 = vld [vmem:[%s2] sm:$0xff]
    %v64 = vld [vmem:[%s2 + $0x8] sm:$0xff]
    %v65 = vld [vmem:[%s2 + $0x10] sm:$0xff]
    %v66 = vld [vmem:[%s2 + $0x18] sm:$0xff]
    %v67 = vld [vmem:[%s2 + $0x20] sm:$0xff]
    %v68 = vld [vmem:[%s2 + $0x28] sm:$0xff]
    %v69 = vld [vmem:[%s2 + $0x30] sm:$0xff]
    %v70 = vld [vmem:[%s2 + $0x38] sm:$0xff]
    %v71 = vld [vmem:[%s4] sm:$0xff]
    %v72 = vld [vmem:[%s4 + $0x8] sm:$0xff]
    %v73 = vld [vmem:[%s4 + $0x10] sm:$0xff]
    %v74 = vld [vmem:[%s4 + $0x18] sm:$0xff]
    %v75 = vld [vmem:[%s6] sm:$0xff]
    %v76 = vld [vmem:[%s6 + $0x8] sm:$0xff]
    %v77 = vld [vmem:[%s8] sm:$0xff]
    %v78 = vld [vmem:[%s10] sm:$0xf]
    %v79 = vld [vmem:[%s12] sm:$0x3]
    %v80 = vld [vmem:[%s0] sm:$0xff]
    %v81 = vld [vmem:[%s0 + $0x8] sm:$0x1f]
    %v82 = vpack.c.bf16 %v81, %v80
    %84 = vset.pattern.permute.xlu0 0
    %85 = vperm.xlu0 %84, %v63
    %v86 = vpop.permute.xlu0 %85
    %89 = vset.pattern.permute.xlu0 0
    %90 = vperm.xlu0 %89, %v64
    %v91 = vpop.permute.xlu0 %90
    %94 = vset.pattern.permute.xlu0 0
    %95 = vperm.xlu0 %94, %v65
    %v96 = vpop.permute.xlu0 %95
    %99 = vset.pattern.permute.xlu0 0
    %100 = vperm.xlu0 %99, %v66
    %v101 = vpop.permute.xlu0 %100
    %104 = vset.pattern.permute.xlu0 0
    %105 = vperm.xlu0 %104, %v67
    %v106 = vpop.permute.xlu0 %105
    %109 = vset.pattern.permute.xlu0 0
    %110 = vperm.xlu0 %109, %v68
    %v111 = vpop.permute.xlu0 %110
    %114 = vset.pattern.permute.xlu0 0
    %115 = vperm.xlu0 %114, %v69
    %v116 = vpop.permute.xlu0 %115
    %119 = vset.pattern.permute.xlu0 0
    %120 = vperm.xlu0 %119, %v70
    %v121 = vpop.permute.xlu0 %120
    %v131 = vunpack.c.l.b16 %v46
    %v132 = vunpack.c.l.b16 %v47
    %v133 = vunpack.c.l.b16 %v48
    %v134 = vunpack.c.l.b16 %v49
    %v135 = vunpack.c.l.b16 %v50
    %v136 = vunpack.c.l.b16 %v51
    %v137 = vunpack.c.l.b16 %v52
    %v138 = vunpack.c.l.b16 %v53
    %v139 = vpack.c.b16 %v132, %v131
    %v140 = vpack.c.b16 %v134, %v133
    %v141 = vpack.c.b16 %v136, %v135
    %v142 = vpack.c.b16 %v138, %v137
    %vm143 = vcmask 105472
    %v145 = vsel %vm143, %v139, 0
    %v148 = vsel %vm143, %v140, 0
    %v151 = vsel %vm143, %v141, 0
    %v154 = vsel %vm143, %v142, 0
    %vm156 = vcmask 1045504
    %vm157 = vcmask 1046528
    %v158 = vsel %vm156, 4294967295, 65535
    %v159 = vsel %vm157, %v158, 0
    %v161 = vand.u32 %v82, %v159
    %163 = vmatprep.subr.bf16.mxu0 0
    %164 = vmatpush1.bf16.msra.mxu0 %v161
    %165 = vmatprep.subr.bf16.mxu0 0
    %166 = vmatpush1.bf16.msra.mxu0 0
    %167 = vmatprep.subr.bf16.mxu0 0
    %168 = vmatpush1.bf16.msra.mxu0 0
    %169 = vmatprep.subr.bf16.mxu0 0
    %170 = vmatpush1.bf16.msra.mxu0 0
    %171 = vmatprep.subr.bf16.mxu0 0
    %172 = vmatpush1.bf16.msra.mxu0 0
    %173 = vmatprep.subr.bf16.mxu0 0
    %174 = vmatpush1.bf16.msra.mxu0 0
    %175 = vmatprep.subr.bf16.mxu0 0
    %176 = vmatpush1.bf16.msra.mxu0 0
    %177 = vmatprep.subr.bf16.mxu0 0
    %178 = vmatpush1.bf16.msra.mxu0 0
    %179 = vmatprep.subr.bf16.mxu0 0
    %180 = vmatpush1.bf16.msra.mxu0 0
    %181 = vmatprep.subr.bf16.mxu0 0
    %182 = vmatpush1.bf16.msra.mxu0 0
    %183 = vmatprep.subr.bf16.mxu0 0
    %184 = vmatpush1.bf16.msra.mxu0 0
    %185 = vmatprep.subr.bf16.mxu0 0
    %186 = vmatpush1.bf16.msra.mxu0 0
    %187 = vmatprep.subr.bf16.mxu0 0
    %188 = vmatpush1.bf16.msra.mxu0 0
    %189 = vmatprep.subr.bf16.mxu0 0
    %190 = vmatpush1.bf16.msra.mxu0 0
    %191 = vmatprep.subr.bf16.mxu0 0
    %192 = vmatpush1.bf16.msra.mxu0 0
    %193 = vmatprep.subr.bf16.mxu0 0
    %194 = vmatpush1.bf16.msra.mxu0 0
    %195 = vmatprep.mubr.bf16.mxu0 0
    %196 = vmatmul.mubr.bf16.gmra.mrb[0].mxu0 %v145
    %v197 = vpop.f32.mrb[0].mxu0
    %v198 = vadd.f32 %v86, %v197
    %v199 = vpop.f32.mrb[0].mxu0
    %v200 = vpop.f32.mrb[0].mxu0
    %v201 = vadd.f32 %v91, %v200
    %v202 = vpop.f32.mrb[0].mxu0
    %203 = vmatprep.mubr.bf16.mxu0 0
    %204 = vmatmul.mubr.bf16.gmra.mrb[0].mxu0 %v148
    %v205 = vpop.f32.mrb[0].mxu0
    %v206 = vadd.f32 %v96, %v205
    %v207 = vpop.f32.mrb[0].mxu0
    %v208 = vpop.f32.mrb[0].mxu0
    %v209 = vadd.f32 %v101, %v208
    %v210 = vpop.f32.mrb[0].mxu0
    %211 = vmatprep.mubr.bf16.mxu0 0
    %212 = vmatmul.mubr.bf16.gmra.mrb[0].mxu0 %v151
    %v213 = vpop.f32.mrb[0].mxu0
    %v214 = vadd.f32 %v106, %v213
    %v215 = vpop.f32.mrb[0].mxu0
    %v216 = vpop.f32.mrb[0].mxu0
    %v217 = vadd.f32 %v111, %v216
    %v218 = vpop.f32.mrb[0].mxu0
    %219 = vmatprep.mubr.bf16.mxu0 0
    %220 = vmatmul.mubr.bf16.gmra.mrb[0].mxu0 %v154
    %v221 = vpop.f32.mrb[0].mxu0
    %v222 = vadd.f32 %v116, %v221
    %v223 = vpop.f32.mrb[0].mxu0
    %v224 = vpop.f32.mrb[0].mxu0
    %v225 = vadd.f32 %v121, %v224
    %v226 = vpop.f32.mrb[0].mxu0
    %227 = vdwg.mxu0
    %v228 = vmax.f32 %v198, 0.0
    %v229 = vmax.f32 %v201, 0.0
    %v230 = vmax.f32 %v206, 0.0
    %v231 = vmax.f32 %v209, 0.0
    %v232 = vmax.f32 %v214, 0.0
    %v233 = vmax.f32 %v217, 0.0
    %v234 = vmax.f32 %v222, 0.0
    %v235 = vmax.f32 %v225, 0.0
    %v236 = vpack.c.bf16 %v229, %v228
    %v237 = vpack.c.bf16 %v231, %v230
    %v238 = vpack.c.bf16 %v233, %v232
    %v239 = vpack.c.bf16 %v235, %v234
    %241 = vset.pattern.permute.xlu0 0
    %242 = vperm.xlu0 %241, %v71
    %v243 = vpop.permute.xlu0 %242
    %246 = vset.pattern.permute.xlu0 0
    %247 = vperm.xlu0 %246, %v72
    %v248 = vpop.permute.xlu0 %247
    %251 = vset.pattern.permute.xlu0 0
    %252 = vperm.xlu0 %251, %v73
    %v253 = vpop.permute.xlu0 %252
    %256 = vset.pattern.permute.xlu0 0
    %257 = vperm.xlu0 %256, %v74
    %v258 = vpop.permute.xlu0 %257
    %v264 = vunpack.c.l.b16 %v54
    %v265 = vunpack.c.l.b16 %v55
    %v266 = vunpack.c.l.b16 %v56
    %v267 = vunpack.c.l.b16 %v57
    %v268 = vpack.c.b16 %v265, %v264
    %v269 = vpack.c.b16 %v267, %v266
    %vm270 = vcmask 523264
    %v272 = vsel %vm270, %v268, 0
    %v275 = vsel %vm270, %v269, 0
    %277 = vmatprep.subr.bf16.mxu0 0
    %278 = vmatpush1.bf16.msra.mxu0 %v236
    %279 = vmatprep.subr.bf16.mxu0 0
    %280 = vmatpush1.bf16.msra.mxu0 %v237
    %281 = vmatprep.subr.bf16.mxu0 0
    %282 = vmatpush1.bf16.msra.mxu0 %v238
    %283 = vmatprep.subr.bf16.mxu0 0
    %284 = vmatpush1.bf16.msra.mxu0 %v239
    %285 = vmatprep.subr.bf16.mxu0 0
    %286 = vmatpush1.bf16.msra.mxu0 0
    %287 = vmatprep.subr.bf16.mxu0 0
    %288 = vmatpush1.bf16.msra.mxu0 0
    %289 = vmatprep.subr.bf16.mxu0 0
    %290 = vmatpush1.bf16.msra.mxu0 0
    %291 = vmatprep.subr.bf16.mxu0 0
    %292 = vmatpush1.bf16.msra.mxu0 0
    %293 = vmatprep.subr.bf16.mxu0 0
    %294 = vmatpush1.bf16.msra.mxu0 0
    %295 = vmatprep.subr.bf16.mxu0 0
    %296 = vmatpush1.bf16.msra.mxu0 0
    %297 = vmatprep.subr.bf16.mxu0 0
    %298 = vmatpush1.bf16.msra.mxu0 0
    %299 = vmatprep.subr.bf16.mxu0 0
    %300 = vmatpush1.bf16.msra.mxu0 0
    %301 = vmatprep.subr.bf16.mxu0 0
    %302 = vmatpush1.bf16.msra.mxu0 0
    %303 = vmatprep.subr.bf16.mxu0 0
    %304 = vmatpush1.bf16.msra.mxu0 0
    %305 = vmatprep.subr.bf16.mxu0 0
    %306 = vmatpush1.bf16.msra.mxu0 0
    %307 = vmatprep.subr.bf16.mxu0 0
    %308 = vmatpush1.bf16.msra.mxu0 0
    %309 = vmatprep.mubr.bf16.mxu0 0
    %310 = vmatmul.mubr.bf16.gmra.mrb[0].mxu0 %v272
    %v311 = vpop.f32.mrb[0].mxu0
    %v312 = vadd.f32 %v243, %v311
    %v313 = vpop.f32.mrb[0].mxu0
    %v314 = vpop.f32.mrb[0].mxu0
    %v315 = vadd.f32 %v248, %v314
    %v316 = vpop.f32.mrb[0].mxu0
    %317 = vmatprep.mubr.bf16.mxu0 0
    %318 = vmatmul.mubr.bf16.gmra.mrb[0].mxu0 %v275
    %v319 = vpop.f32.mrb[0].mxu0
    %v320 = vadd.f32 %v253, %v319
    %v321 = vpop.f32.mrb[0].mxu0
    %v322 = vpop.f32.mrb[0].mxu0
    %v323 = vadd.f32 %v258, %v322
    %v324 = vpop.f32.mrb[0].mxu0
    %325 = vdwg.mxu0
    %v326 = vmax.f32 %v312, 0.0
    %v327 = vmax.f32 %v315, 0.0
    %v328 = vmax.f32 %v320, 0.0
    %v329 = vmax.f32 %v323, 0.0
    %v330 = vpack.c.bf16 %v327, %v326
    %v331 = vpack.c.bf16 %v329, %v328
    %333 = vset.pattern.permute.xlu0 0
    %334 = vperm.xlu0 %333, %v75
    %v335 = vpop.permute.xlu0 %334
    %338 = vset.pattern.permute.xlu0 0
    %339 = vperm.xlu0 %338, %v76
    %v340 = vpop.permute.xlu0 %339
    %v344 = vunpack.c.l.b16 %v58
    %v345 = vunpack.c.l.b16 %v59
    %v346 = vpack.c.b16 %v345, %v344
    %vm347 = vcmask 261120
    %v349 = vsel %vm347, %v346, 0
    %351 = vmatprep.subr.bf16.mxu0 0
    %352 = vmatpush1.bf16.msra.mxu0 %v330
    %353 = vmatprep.subr.bf16.mxu0 0
    %354 = vmatpush1.bf16.msra.mxu0 %v331
    %355 = vmatprep.subr.bf16.mxu0 0
    %356 = vmatpush1.bf16.msra.mxu0 0
    %357 = vmatprep.subr.bf16.mxu0 0
    %358 = vmatpush1.bf16.msra.mxu0 0
    %359 = vmatprep.subr.bf16.mxu0 0
    %360 = vmatpush1.bf16.msra.mxu0 0
    %361 = vmatprep.subr.bf16.mxu0 0
    %362 = vmatpush1.bf16.msra.mxu0 0
    %363 = vmatprep.subr.bf16.mxu0 0
    %364 = vmatpush1.bf16.msra.mxu0 0
    %365 = vmatprep.subr.bf16.mxu0 0
    %366 = vmatpush1.bf16.msra.mxu0 0
    %367 = vmatprep.subr.bf16.mxu0 0
    %368 = vmatpush1.bf16.msra.mxu0 0
    %369 = vmatprep.subr.bf16.mxu0 0
    %370 = vmatpush1.bf16.msra.mxu0 0
    %371 = vmatprep.subr.bf16.mxu0 0
    %372 = vmatpush1.bf16.msra.mxu0 0
    %373 = vmatprep.subr.bf16.mxu0 0
    %374 = vmatpush1.bf16.msra.mxu0 0
    %375 = vmatprep.subr.bf16.mxu0 0
    %376 = vmatpush1.bf16.msra.mxu0 0
    %377 = vmatprep.subr.bf16.mxu0 0
    %378 = vmatpush1.bf16.msra.mxu0 0
    %379 = vmatprep.subr.bf16.mxu0 0
    %380 = vmatpush1.bf16.msra.mxu0 0
    %381 = vmatprep.subr.bf16.mxu0 0
    %382 = vmatpush1.bf16.msra.mxu0 0
    %383 = vmatprep.mubr.bf16.mxu0 0
    %384 = vmatmul.mubr.bf16.gmra.mrb[0].mxu0 %v349
    %v385 = vpop.f32.mrb[0].mxu0
    %v386 = vadd.f32 %v335, %v385
    %v387 = vpop.f32.mrb[0].mxu0
    %v388 = vpop.f32.mrb[0].mxu0
    %v389 = vadd.f32 %v340, %v388
    %v390 = vpop.f32.mrb[0].mxu0
    %391 = vdwg.mxu0
    %v392 = vmax.f32 %v386, 0.0
    %v393 = vmax.f32 %v389, 0.0
    %v394 = vpack.c.bf16 %v393, %v392
    %396 = vset.pattern.permute.xlu0 0
    %397 = vperm.xlu0 %396, %v77
    %v398 = vpop.permute.xlu0 %397
    %vm400 = vcmask 130048
    %v402 = vsel %vm400, %v60, 0
    %404 = vmatprep.subr.bf16.mxu0 0
    %405 = vmatpush1.bf16.msra.mxu0 %v394
    %406 = vmatprep.subr.bf16.mxu0 0
    %407 = vmatpush1.bf16.msra.mxu0 0
    %408 = vmatprep.subr.bf16.mxu0 0
    %409 = vmatpush1.bf16.msra.mxu0 0
    %410 = vmatprep.subr.bf16.mxu0 0
    %411 = vmatpush1.bf16.msra.mxu0 0
    %412 = vmatprep.subr.bf16.mxu0 0
    %413 = vmatpush1.bf16.msra.mxu0 0
    %414 = vmatprep.subr.bf16.mxu0 0
    %415 = vmatpush1.bf16.msra.mxu0 0
    %416 = vmatprep.subr.bf16.mxu0 0
    %417 = vmatpush1.bf16.msra.mxu0 0
    %418 = vmatprep.subr.bf16.mxu0 0
    %419 = vmatpush1.bf16.msra.mxu0 0
    %420 = vmatprep.subr.bf16.mxu0 0
    %421 = vmatpush1.bf16.msra.mxu0 0
    %422 = vmatprep.subr.bf16.mxu0 0
    %423 = vmatpush1.bf16.msra.mxu0 0
    %424 = vmatprep.subr.bf16.mxu0 0
    %425 = vmatpush1.bf16.msra.mxu0 0
    %426 = vmatprep.subr.bf16.mxu0 0
    %427 = vmatpush1.bf16.msra.mxu0 0
    %428 = vmatprep.subr.bf16.mxu0 0
    %429 = vmatpush1.bf16.msra.mxu0 0
    %430 = vmatprep.subr.bf16.mxu0 0
    %431 = vmatpush1.bf16.msra.mxu0 0
    %432 = vmatprep.subr.bf16.mxu0 0
    %433 = vmatpush1.bf16.msra.mxu0 0
    %434 = vmatprep.subr.bf16.mxu0 0
    %435 = vmatpush1.bf16.msra.mxu0 0
    %436 = vmatprep.mubr.bf16.mxu0 0
    %437 = vmatmul.mubr.bf16.gmra.mrb[0].mxu0 %v402
    %v438 = vpop.f32.mrb[0].mxu0
    %v439 = vadd.f32 %v398, %v438
    %v440 = vpop.f32.mrb[0].mxu0
    %v441 = vpop.f32.mrb[0].mxu0
    %v442 = vpop.f32.mrb[0].mxu0
    %443 = vdwg.mxu0
    %v444 = vmax.f32 %v439, 0.0
    %v445 = vpack.c.bf16 %v444, %v444
    %447 = vset.pattern.permute.xlu0 0
    %448 = vperm.xlu0 %447, %v78
    %v449 = vpop.permute.xlu0 %448
    %vm451 = vcmask 64512
    %v453 = vsel %vm451, %v61, 0
    %vm455 = vcmask 1043456
    %v457 = vsel %vm455, %v445, 0
    %459 = vmatprep.subr.bf16.mxu0 0
    %460 = vmatpush1.bf16.msra.mxu0 %v457
    %461 = vmatprep.subr.bf16.mxu0 0
    %462 = vmatpush1.bf16.msra.mxu0 0
    %463 = vmatprep.subr.bf16.mxu0 0
    %464 = vmatpush1.bf16.msra.mxu0 0
    %465 = vmatprep.subr.bf16.mxu0 0
    %466 = vmatpush1.bf16.msra.mxu0 0
    %467 = vmatprep.subr.bf16.mxu0 0
    %468 = vmatpush1.bf16.msra.mxu0 0
    %469 = vmatprep.subr.bf16.mxu0 0
    %470 = vmatpush1.bf16.msra.mxu0 0
    %471 = vmatprep.subr.bf16.mxu0 0
    %472 = vmatpush1.bf16.msra.mxu0 0
    %473 = vmatprep.subr.bf16.mxu0 0
    %474 = vmatpush1.bf16.msra.mxu0 0
    %475 = vmatprep.subr.bf16.mxu0 0
    %476 = vmatpush1.bf16.msra.mxu0 0
    %477 = vmatprep.subr.bf16.mxu0 0
    %478 = vmatpush1.bf16.msra.mxu0 0
    %479 = vmatprep.subr.bf16.mxu0 0
    %480 = vmatpush1.bf16.msra.mxu0 0
    %481 = vmatprep.subr.bf16.mxu0 0
    %482 = vmatpush1.bf16.msra.mxu0 0
    %483 = vmatprep.subr.bf16.mxu0 0
    %484 = vmatpush1.bf16.msra.mxu0 0
    %485 = vmatprep.subr.bf16.mxu0 0
    %486 = vmatpush1.bf16.msra.mxu0 0
    %487 = vmatprep.subr.bf16.mxu0 0
    %488 = vmatpush1.bf16.msra.mxu0 0
    %489 = vmatprep.subr.bf16.mxu0 0
    %490 = vmatpush1.bf16.msra.mxu0 0
    %491 = vmatprep.mubr.bf16.mxu0 0
    %492 = vmatmul.mubr.bf16.gmra.mrb[0].mxu0 %v453
    %v493 = vpop.f32.mrb[0].mxu0
    %v494 = vadd.f32 %v449, %v493
    %v495 = vpop.f32.mrb[0].mxu0
    %v496 = vpop.f32.mrb[0].mxu0
    %v497 = vpop.f32.mrb[0].mxu0
    %498 = vdwg.mxu0
    %v499 = vmax.f32 %v494, 0.0
    %v500 = vpack.c.bf16 %v499, %v499
    %502 = vset.pattern.permute.xlu0 0
    %503 = vperm.xlu0 %502, %v79
    %v504 = vpop.permute.xlu0 %503
    %vm506 = vcmask 31744
    %v508 = vsel %vm506, %v62, 0
    %vm510 = vcmask 1041408
    %v512 = vsel %vm510, %v500, 0
    %514 = vmatprep.subr.bf16.mxu0 0
    %515 = vmatpush1.bf16.msra.mxu0 %v512
    %516 = vmatprep.subr.bf16.mxu0 0
    %517 = vmatpush1.bf16.msra.mxu0 0
    %518 = vmatprep.subr.bf16.mxu0 0
    %519 = vmatpush1.bf16.msra.mxu0 0
    %520 = vmatprep.subr.bf16.mxu0 0
    %521 = vmatpush1.bf16.msra.mxu0 0
    %522 = vmatprep.subr.bf16.mxu0 0
    %523 = vmatpush1.bf16.msra.mxu0 0
    %524 = vmatprep.subr.bf16.mxu0 0
    %525 = vmatpush1.bf16.msra.mxu0 0
    %526 = vmatprep.subr.bf16.mxu0 0
    %527 = vmatpush1.bf16.msra.mxu0 0
    %528 = vmatprep.subr.bf16.mxu0 0
    %529 = vmatpush1.bf16.msra.mxu0 0
    %530 = vmatprep.subr.bf16.mxu0 0
    %531 = vmatpush1.bf16.msra.mxu0 0
    %532 = vmatprep.subr.bf16.mxu0 0
    %533 = vmatpush1.bf16.msra.mxu0 0
    %534 = vmatprep.subr.bf16.mxu0 0
    %535 = vmatpush1.bf16.msra.mxu0 0
    %536 = vmatprep.subr.bf16.mxu0 0
    %537 = vmatpush1.bf16.msra.mxu0 0
    %538 = vmatprep.subr.bf16.mxu0 0
    %539 = vmatpush1.bf16.msra.mxu0 0
    %540 = vmatprep.subr.bf16.mxu0 0
    %541 = vmatpush1.bf16.msra.mxu0 0
    %542 = vmatprep.subr.bf16.mxu0 0
    %543 = vmatpush1.bf16.msra.mxu0 0
    %544 = vmatprep.subr.bf16.mxu0 0
    %545 = vmatpush1.bf16.msra.mxu0 0
    %546 = vmatprep.mubr.bf16.mxu0 0
    %547 = vmatmul.mubr.bf16.gmra.mrb[0].mxu0 %v508
    %v548 = vpop.f32.mrb[0].mxu0
    %v549 = vadd.f32 %v504, %v548
    %v550 = vpop.f32.mrb[0].mxu0
    %v551 = vpop.f32.mrb[0].mxu0
    %v552 = vpop.f32.mrb[0].mxu0
    %553 = vdwg.mxu0
    %554 = vst [vmem:[#allocation2] sm:$0x3] %v549
    // Predicated region
    $region54: #{tpu_custom_call.1} parent=1 // pred_check
      _
    $region55: #{tpu_custom_call.1} parent=1 // pred_check_branch
      %556 = sbr.rel (0) target = $region57
    $region56: #{tpu_custom_call.1} parent=1 // pred_region
      %s558 = ssub.s32 32, 32
      %559 = vsyncadd [#allocation3], %s558
      %s561 = sshll.u32 [#allocation2], 4
      %s562 = int_to_ptr.vmem [resolvable:$true] %s561
      %564 = dma.vmem_to_hbm [thread:$0]  %s562, 32, %s13, [#allocation3]
    $region57: #{tpu_custom_call.1} parent=1 // pred_fallthru
      _
    // Predicated region
    $region58: #{tpu_custom_call.1} parent=1 // pred_check
      _
    $region59: #{tpu_custom_call.1} parent=1 // pred_check_branch
      %566 = sbr.rel (0) target = $region61
    $region60: #{tpu_custom_call.1} parent=1 // pred_region
      %567 = dma.done [#allocation3], 32
    $region61: #{tpu_custom_call.1} parent=1 // pred_fallthru
      _
    %568 = vsyncpa [#allocation3], 1

</llo_original>
